<compile_context>
chip_gen: v6e
topology: v6e:2x2x1
jax: 0.10.0
libtpu: 0.0.40
codegen_flags: <defaults>
</compile_context>

<pallas_src>
import functools

import jax
import jax.numpy as jnp
from jax.experimental import pallas as pl
from jax.experimental.pallas import tpu as pltpu

LANE = 128        # TPU lane width (last-dim tile quantum)
ROW_ALIGN = 16    # sublane quantum covering bf16 packing (16 rows / vreg)


def _round_up(x, m):
    return (x + m - 1) // m * m


def _largest_divisor_chunk(total, desired, quantum=LANE):
    """Largest multiple of `quantum` that divides `total` and is <= `desired`."""
    best = quantum
    c = quantum
    upper = min(desired, total)
    while c <= upper:
        if total % c == 0:
            best = c
        c += quantum
    return best


def _ffn_kernel(x_ref, w1_ref, b1_ref, w2_ref, b2_ref, o_ref, acc_ref):
    """One (token-tile i, hidden-chunk k) step of ReLU(x@W1+b1)@W2 + b2.

    x_ref  : (TM, Dp)  input dtype (cast to compute dtype in-kernel)
    w1_ref : (Dp, TH)  compute dtype          b1_ref : (1, TH) f32
    w2_ref : (TH, Dp)  compute dtype          b2_ref : (1, Dp) f32
    o_ref  : (TM, Dp)  x dtype
    acc_ref: (TM, Dp)  f32 accumulator, resident across the hidden (k) axis
    """
    k = pl.program_id(1)

    @pl.when(k == 0)
    def _():
        acc_ref[...] = jnp.zeros_like(acc_ref)

    # In-kernel cast of the activation tile to the weight/compute dtype.
    x = x_ref[...].astype(w1_ref.dtype)

    # First linear over this hidden chunk (MXU, f32 accumulation); bias + ReLU
    # stay in f32 (v5e VPU has no bf16 path).
    h = jnp.dot(x, w1_ref[...], preferred_element_type=jnp.float32)
    h = jnp.maximum(h + b1_ref[...], 0.0)

    # Second linear: deliberate downcast of the hidden chunk to the compute
    # dtype so the MXU runs at full (bf16) rate; accumulate partial in f32.
    acc_ref[...] += jnp.dot(h.astype(w2_ref.dtype), w2_ref[...],
                            preferred_element_type=jnp.float32)

    @pl.when(k == pl.num_programs(1) - 1)
    def _():
        o_ref[...] = (acc_ref[...] + b2_ref[...]).astype(o_ref.dtype)


def prepare_params(w1, b1, w2, b2, *, compute_dtype=jnp.float32):
    """One-time parameter prep -- call OUTSIDE the per-step jit.

    * pads feature dims to lane multiples (128) -> lane-dense blocks / stores
    * casts weights to the MXU compute dtype exactly once (no per-call recast)
    * keeps biases in f32 (the epilogue accumulates in f32)
    Padding with zeros is exact: zero W1 rows / W2 rows-cols contribute zero.
    """
    D, H = w1.shape
    Dp, Hp = _round_up(D, LANE), _round_up(H, LANE)
    w1p = jnp.pad(w1.astype(compute_dtype), ((0, Dp - D), (0, Hp - H)))
    w2p = jnp.pad(w2.astype(compute_dtype), ((0, Hp - H), (0, Dp - D)))
    b1p = jnp.pad(b1.reshape(1, -1).astype(jnp.float32), ((0, 0), (0, Hp - H)))
    b2p = jnp.pad(b2.reshape(1, -1).astype(jnp.float32), ((0, 0), (0, Dp - D)))
    return w1p, b1p, w2p, b2p


@functools.partial(jax.jit, static_argnames=("tm", "th"))
def nacjac_feedforward(x, w1, b1, w2, b2, *, tm=512, th=512):
    """Fused FFN forward: ReLU(x @ W1 + b1) @ W2 + b2 (Dropout = eval identity).

    x : (B, T, D) any float dtype (cast to the weight dtype inside the kernel).
    w1: (Dp, Hp), b1: (1, Hp), w2: (Hp, Dp), b2: (1, Dp) from prepare_params.
    tm: token-tile size (sweep 256/512/1024; multiple of 256 preferred at scale).
    th: hidden-chunk size (sweep 512/1024).
    """
    B, T, D = x.shape
    Dp, Hp = w1.shape
    M = B * T

    # Token tile: capped at tm, rounded to 16 rows (bf16 sublane packing).
    TM = min(tm, _round_up(M, ROW_ALIGN))
    M_pad = _round_up(M, TM)
    # Hidden chunk: largest multiple of 128 dividing Hp that is <= th.
    TH = _largest_divisor_chunk(Hp, th)
    grid = (M_pad // TM, Hp // TH)

    x2d = x.reshape(M, D)
    if (M_pad != M) or (Dp != D):
        x2d = jnp.pad(x2d, ((0, M_pad - M), (0, Dp - D)))

    x_item = jnp.dtype(x.dtype).itemsize
    w_item = jnp.dtype(w1.dtype).itemsize
    cost = pl.CostEstimate(
        flops=4 * M * Dp * Hp,                       # two matmuls
        transcendentals=0,
        bytes_accessed=(M * Dp * x_item              # x in
                        + 2 * Dp * Hp * w_item       # w1 + w2
                        + (Hp + Dp) * 4              # biases (f32)
                        + M * Dp * x_item))          # out

    # VMEM budget: double-buffered x/out/weight-chunk blocks + f32 accumulator,
    # sized against the actual chip's VMEM (v7x: 64 MiB/TC, v5e/v6e: 128 MiB).
    per_step = (2 * TM * Dp * x_item                 # x blocks
                + 2 * TM * Dp * x_item               # out blocks
                + 2 * 2 * TH * Dp * w_item           # w1/w2 chunk blocks
                + 2 * (TH + Dp) * 4                  # bias blocks
                + TM * Dp * 4)                       # f32 accumulator
    try:
        physical = int(pltpu.get_tpu_info().vmem_capacity_bytes)
    except Exception:  # pragma: no cover - conservative fallback (v7x per-core)
        physical = 64 * 1024 * 1024
    vmem_limit = int(min(max(2 * per_step, 32 * 1024 * 1024),
                         int(0.85 * physical)))

    out2d = pl.pallas_call(
        _ffn_kernel,
        out_shape=jax.ShapeDtypeStruct((M_pad, Dp), x.dtype),
        grid_spec=pltpu.PrefetchScalarGridSpec(
            num_scalar_prefetch=0,
            grid=grid,
            in_specs=[
                pl.BlockSpec((TM, Dp), lambda i, k: (i, 0)),   # x: k-invariant
                pl.BlockSpec((Dp, TH), lambda i, k: (0, k)),   # w1 chunk
                pl.BlockSpec((1, TH), lambda i, k: (0, k)),    # b1 chunk
                pl.BlockSpec((TH, Dp), lambda i, k: (k, 0)),   # w2 chunk
                pl.BlockSpec((1, Dp), lambda i, k: (0, 0)),    # b2: invariant
            ],
            out_specs=pl.BlockSpec((TM, Dp), lambda i, k: (i, 0)),
            scratch_shapes=[pltpu.VMEM((TM, Dp), jnp.float32)],
        ),
        compiler_params=pltpu.CompilerParams(
            dimension_semantics=("parallel", "arbitrary"),     # megacore on M
            vmem_limit_bytes=vmem_limit),
        cost_estimate=cost,
    )(x2d, w1, b1, w2, b2)

    if (M_pad != M) or (Dp != D):
        out2d = out2d[:M, :D]
    return out2d.reshape(B, T, D)


def init_params(key, n_embed):
    """nn.Linear-style init; weights stored transposed (in, out) so the kernel
    computes x @ W + b (identical to x @ weight.T + bias)."""
    hidden = 4 * n_embed
    k1, k2, k3, k4 = jax.random.split(key, 4)
    lim1 = 1.0 / jnp.sqrt(n_embed)
    lim2 = 1.0 / jnp.sqrt(hidden)
    w1 = jax.random.uniform(k1, (n_embed, hidden), jnp.float32, -lim1, lim1)
    b1 = jax.random.uniform(k2, (hidden,), jnp.float32, -lim1, lim1)
    w2 = jax.random.uniform(k3, (hidden, n_embed), jnp.float32, -lim2, lim2)
    b2 = jax.random.uniform(k4, (n_embed,), jnp.float32, -lim2, lim2)
    return w1, b1, w2, b2


if __name__ == "__main__":
    HIGH = jax.lax.Precision.HIGHEST

    # ---- Test 1: tiny shape from the module spec (single tile / single chunk)
    key = jax.random.PRNGKey(0)
    n_embed = 32
    batch, seq = 2, 8
    kx, kp = jax.random.split(key)
    x = jax.random.normal(kx, (batch, seq, n_embed), jnp.float32)
    w1, b1, w2, b2 = init_params(kp, n_embed)

    x2 = x.reshape(-1, n_embed)
    ref = jnp.maximum(jnp.dot(x2, w1, precision=HIGH) + b1, 0.0)
    ref = (jnp.dot(ref, w2, precision=HIGH) + b2).reshape(x.shape)

    p_f32 = prepare_params(w1, b1, w2, b2, compute_dtype=jnp.float32)
    out = jax.block_until_ready(nacjac_feedforward(x, *p_f32))
    assert out.shape == (batch, seq, n_embed)
    assert jnp.allclose(out, ref, atol=1e-5, rtol=1e-5)

    # ---- Test 2: bf16 MXU path, compared against a matching bf16 reference
    p_bf16 = prepare_params(w1, b1, w2, b2, compute_dtype=jnp.bfloat16)
    out_bf = jax.block_until_ready(nacjac_feedforward(x, *p_bf16))
    xb = x2.astype(jnp.bfloat16)
    h_ref = jnp.maximum(
        jnp.dot(xb, w1.astype(jnp.bfloat16),
                preferred_element_type=jnp.float32) + b1, 0.0)
    ref_bf = (jnp.dot(h_ref.astype(jnp.bfloat16), w2.astype(jnp.bfloat16),
                      preferred_element_type=jnp.float32) + b2).reshape(x.shape)
    assert out_bf.shape == (batch, seq, n_embed)
    assert jnp.allclose(out_bf, ref_bf.astype(x.dtype), atol=2e-2, rtol=2e-2)

    # ---- Test 3: exercise multiple token tiles + multiple hidden chunks
    #      (M=144 -> 3 tiles of TM=64; H=512 -> 4 chunks of TH=128), plus
    #      row padding (M_pad=192) and the accumulator init/finalize path.
    n_embed2, batch2, seq2 = 128, 2, 72
    kx2, kp2 = jax.random.split(jax.random.PRNGKey(1))
    xL = jax.random.normal(kx2, (batch2, seq2, n_embed2), jnp.float32)
    w1L, b1L, w2L, b2L = init_params(kp2, n_embed2)
    xL2 = xL.reshape(-1, n_embed2)
    refL = jnp.maximum(jnp.dot(xL2, w1L, precision=HIGH) + b1L, 0.0)
    refL = (jnp.dot(refL, w2L, precision=HIGH) + b2L).reshape(xL.shape)
    pL = prepare_params(w1L, b1L, w2L, b2L, compute_dtype=jnp.float32)
    outL = jax.block_until_ready(nacjac_feedforward(xL, *pL, tm=64, th=128))
    assert outL.shape == (batch2, seq2, n_embed2)
    assert jnp.allclose(outL, refL, atol=1e-4, rtol=1e-4)

    print("KERNEL_OK")
</pallas_src>

<mosaic_0001>
module attributes {stable_mosaic.version = 11 : i64} {
  func.func @_ffn_kernel(%arg0: i32, %arg1: i32, %arg2: memref<16x128xf32, #tpu.memory_space<vmem>>, %arg3: memref<128x128xf32, #tpu.memory_space<vmem>>, %arg4: memref<1x128xf32, #tpu.memory_space<vmem>>, %arg5: memref<128x128xf32, #tpu.memory_space<vmem>>, %arg6: memref<1x128xf32, #tpu.memory_space<vmem>>, %arg7: memref<16x128xf32, #tpu.memory_space<vmem>>, %arg8: memref<16x128xf32, #tpu.memory_space<vmem>>) attributes {dimension_semantics = [#tpu.dimension_semantics<parallel>, #tpu.dimension_semantics<arbitrary>], iteration_bounds = array<i64: 1, 1>, scalar_prefetch = 0 : i64, scratch_operands = 1 : i64, tpu.core_type = #tpu.core_type<tc>, window_params = [{transform_indices = @transform_0, window_bounds = array<i64: 16, 128>}, {transform_indices = @transform_1, window_bounds = array<i64: 128, 128>}, {transform_indices = @transform_2, window_bounds = array<i64: 1, 128>}, {transform_indices = @transform_3, window_bounds = array<i64: 128, 128>}, {pipeline_mode = #tpu.pipeline_mode<synchronous>, transform_indices = @transform_4, window_bounds = array<i64: 1, 128>}, {transform_indices = @transform_5, window_bounds = array<i64: 16, 128>}]} {
    %c0_i32 = arith.constant 0 : i32
    %0 = arith.cmpi eq, %arg1, %c0_i32 : i32
    %1 = arith.extui %0 : i1 to i32
    %c0_i32_0 = arith.constant 0 : i32
    %2 = arith.cmpi ne, %1, %c0_i32_0 : i32
    scf.if %2 {
      %cst_16 = arith.constant 0.000000e+00 : f32
      %19 = vector.broadcast %cst_16 : f32 to vector<16x128xf32>
      %c0_17 = arith.constant 0 : index
      %c0_18 = arith.constant 0 : index
      %20 = vector.load %arg8[%c0_17, %c0_18] : memref<16x128xf32, #tpu.memory_space<vmem>>, vector<16x128xf32>
      tpu.vector_store %arg8[%c0_17, %c0_18], %19 {strides = array<i32>} : memref<16x128xf32, #tpu.memory_space<vmem>>, vector<16x128xf32>,
    } else {
    }
    %c0 = arith.constant 0 : index
    %c0_1 = arith.constant 0 : index
    %3 = vector.load %arg2[%c0, %c0_1] : memref<16x128xf32, #tpu.memory_space<vmem>>, vector<16x128xf32>
    %c0_2 = arith.constant 0 : index
    %c0_3 = arith.constant 0 : index
    %4 = vector.load %arg3[%c0_2, %c0_3] : memref<128x128xf32, #tpu.memory_space<vmem>>, vector<128x128xf32>
    %cst = arith.constant dense<0.000000e+00> : vector<16x128xf32>
    %5 = tpu.matmul %3, %4, %cst {dimension_numbers = #tpu.dot_dimension_numbers<[1], [0], [0], [1], [0, 0, 1, 1], [], []>} : vector<16x128xf32>, vector<128x128xf32>, vector<16x128xf32> -> vector<16x128xf32>
    %c0_4 = arith.constant 0 : index
    %c0_5 = arith.constant 0 : index
    %6 = vector.load %arg4[%c0_4, %c0_5] : memref<1x128xf32, #tpu.memory_space<vmem>>, vector<1x128xf32>
    %7 = vector.broadcast %6 : vector<1x128xf32> to vector<16x128xf32>
    %8 = arith.addf %5, %7 : vector<16x128xf32>
    %cst_6 = arith.constant 0.000000e+00 : f32
    %9 = vector.broadcast %cst_6 : f32 to vector<16x128xf32>
    %10 = arith.maximumf %8, %9 : vector<16x128xf32>
    %c0_7 = arith.constant 0 : index
    %c0_8 = arith.constant 0 : index
    %11 = vector.load %arg8[%c0_7, %c0_8] : memref<16x128xf32, #tpu.memory_space<vmem>>, vector<16x128xf32>
    %c0_9 = arith.constant 0 : index
    %c0_10 = arith.constant 0 : index
    %12 = vector.load %arg5[%c0_9, %c0_10] : memref<128x128xf32, #tpu.memory_space<vmem>>, vector<128x128xf32>
    %cst_11 = arith.constant dense<0.000000e+00> : vector<16x128xf32>
    %13 = tpu.matmul %10, %12, %cst_11 {dimension_numbers = #tpu.dot_dimension_numbers<[1], [0], [0], [1], [0, 0, 1, 1], [], []>} : vector<16x128xf32>, vector<128x128xf32>, vector<16x128xf32> -> vector<16x128xf32>
    %14 = arith.addf %11, %13 : vector<16x128xf32>
    %c0_12 = arith.constant 0 : index
    %c0_13 = arith.constant 0 : index
    %15 = vector.load %arg8[%c0_12, %c0_13] : memref<16x128xf32, #tpu.memory_space<vmem>>, vector<16x128xf32>
    tpu.vector_store %arg8[%c0_12, %c0_13], %14 {strides = array<i32>} : memref<16x128xf32, #tpu.memory_space<vmem>>, vector<16x128xf32>,
    %c0_i32_14 = arith.constant 0 : i32
    %16 = arith.cmpi eq, %arg1, %c0_i32_14 : i32
    %17 = arith.extui %16 : i1 to i32
    %c0_i32_15 = arith.constant 0 : i32
    %18 = arith.cmpi ne, %17, %c0_i32_15 : i32
    scf.if %18 {
      %c0_16 = arith.constant 0 : index
      %c0_17 = arith.constant 0 : index
      %19 = vector.load %arg8[%c0_16, %c0_17] : memref<16x128xf32, #tpu.memory_space<vmem>>, vector<16x128xf32>
      %c0_18 = arith.constant 0 : index
      %c0_19 = arith.constant 0 : index
      %20 = vector.load %arg6[%c0_18, %c0_19] : memref<1x128xf32, #tpu.memory_space<vmem>>, vector<1x128xf32>
      %21 = vector.broadcast %20 : vector<1x128xf32> to vector<16x128xf32>
      %22 = arith.addf %19, %21 : vector<16x128xf32>
      %c0_20 = arith.constant 0 : index
      %c0_21 = arith.constant 0 : index
      %23 = vector.load %arg7[%c0_20, %c0_21] : memref<16x128xf32, #tpu.memory_space<vmem>>, vector<16x128xf32>
      tpu.vector_store %arg7[%c0_20, %c0_21], %22 {strides = array<i32>} : memref<16x128xf32, #tpu.memory_space<vmem>>, vector<16x128xf32>,
    } else {
    }
    return
  }
  func.func @transform_0(%arg0: i32, %arg1: i32) -> (i32, i32) {
    %c0_i32 = arith.constant 0 : i32
    %c0_i32_0 = arith.constant 0 : i32
    return %arg0, %c0_i32 : i32, i32
  }
  func.func @transform_1(%arg0: i32, %arg1: i32) -> (i32, i32) {
    %c0_i32 = arith.constant 0 : i32
    %c0_i32_0 = arith.constant 0 : i32
    return %c0_i32, %arg1 : i32, i32
  }
  func.func @transform_2(%arg0: i32, %arg1: i32) -> (i32, i32) {
    %c0_i32 = arith.constant 0 : i32
    %c0_i32_0 = arith.constant 0 : i32
    return %c0_i32, %arg1 : i32, i32
  }
  func.func @transform_3(%arg0: i32, %arg1: i32) -> (i32, i32) {
    %c0_i32 = arith.constant 0 : i32
    %c0_i32_0 = arith.constant 0 : i32
    return %arg1, %c0_i32 : i32, i32
  }
  func.func @transform_4(%arg0: i32, %arg1: i32) -> (i32, i32) {
    %c0_i32 = arith.constant 0 : i32
    %c0_i32_0 = arith.constant 0 : i32
    %c0_i32_1 = arith.constant 0 : i32
    return %c0_i32, %c0_i32_0 : i32, i32
  }
  func.func @transform_5(%arg0: i32, %arg1: i32) -> (i32, i32) {
    %c0_i32 = arith.constant 0 : i32
    %c0_i32_0 = arith.constant 0 : i32
    return %arg0, %c0_i32 : i32, i32
  }
}

</mosaic_0001>

<llo_original>
// kernel: nacjac_feedforward.1
$region0: #{nacjac_feedforward.1}
  #allocation0 [shape = 'u32[]', space=smem, size = 0x4, offset = 0x4, fixed_abs, tag = 'smem constant byte address 0x4 - core index']
  #allocation1 [shape = 'u32[144,128]{1,0:T(1,128)}', space=vmem, size = 0x12000, scoped, tag = 'internal scratch']
  #allocation2 [shape = 'f32[16,128]{1,0:T(8,128)}', space=vmem, size = 0x2000, scoped, tag = 'scratch operand']
  %s0 = inlined_call_operand.vmem [shape: f32[16,128], index: 0, kind: input, shape index: {}]
  %s1 = inlined_call_operand.hbm [shape: f32[128,128], index: 1, kind: input, shape index: {}]
  %s2 = inlined_call_operand.vmem [shape: f32[1,128], index: 2, kind: input, shape index: {}]
  %s3 = inlined_call_operand.hbm [shape: f32[128,128], index: 3, kind: input, shape index: {}]
  %s4 = inlined_call_operand.vmem [shape: f32[1,128], index: 4, kind: input, shape index: {}]
  %s5 = inlined_call_operand.vmem [shape: f32[16,128], index: 5, kind: output, shape index: {}]
  %s6 = sld [smem:[#allocation0]]
  $region46: #{nacjac_feedforward.1} parent=0
    _
  %s8 = ssub.s32 1, %s6
  %s9 = scalar_select 0, %s8, %s6
  $region1: #{nacjac_feedforward.1} parent=0
    #allocation3 [shape = 'u8[65536]{0}', space=vmem, size = 0x10000, scoped, tag = 'input window, operand 1, single buffered']
    #allocation4 [shape = 's32[1]{0}', space=sflag, size = 0x4, scoped, tag = 'scoped memory for nacjac_feedforward.1']
    #allocation5 [shape = 'u8[65536]{0}', space=vmem, size = 0x10000, scoped, tag = 'input window, operand 3, single buffered']
    #allocation6 [shape = 's32[1]{0}', space=sflag, size = 0x4, scoped, tag = 'scoped memory for nacjac_feedforward.1']
    %10 = vsyncpa [#allocation4], 0
    %11 = vsyncpa [#allocation6], 0
    // Predicated region
    $region2: #{nacjac_feedforward.1} parent=1 // pred_check
      _
    $region3: #{nacjac_feedforward.1} parent=1 // pred_check_branch
      %13 = sbr.rel (0) target = $region5
    $region4: #{nacjac_feedforward.1} parent=1 // pred_region
      _
    $region5: #{nacjac_feedforward.1} parent=1 // pred_fallthru
      _
    // Predicated region
    $region6: #{nacjac_feedforward.1} parent=1 // pred_check
      _
    $region7: #{nacjac_feedforward.1} parent=1 // pred_check_branch
      %15 = sbr.rel (0) target = $region9
    $region8: #{nacjac_feedforward.1} parent=1 // pred_region
      %s17 = ssub.s32 2048, 2048
      %18 = vsyncadd [#allocation4], %s17
      %s19 = sshll.u32 [#allocation3], 4
      %s20 = int_to_ptr.vmem [resolvable:$true] %s19
      %25 = dma.hbm_to_vmem [thread:$0]  %s1, 2048, %s20, [#allocation4], 128, 128, 8
    $region9: #{nacjac_feedforward.1} parent=1 // pred_fallthru
      _
    // Predicated region
    $region10: #{nacjac_feedforward.1} parent=1 // pred_check
      _
    $region11: #{nacjac_feedforward.1} parent=1 // pred_check_branch
      %27 = sbr.rel (0) target = $region13
    $region12: #{nacjac_feedforward.1} parent=1 // pred_region
      _
    $region13: #{nacjac_feedforward.1} parent=1 // pred_fallthru
      _
    // Predicated region
    $region14: #{nacjac_feedforward.1} parent=1 // pred_check
      _
    $region15: #{nacjac_feedforward.1} parent=1 // pred_check_branch
      %29 = sbr.rel (0) target = $region17
    $region16: #{nacjac_feedforward.1} parent=1 // pred_region
      %s31 = ssub.s32 2048, 2048
      %32 = vsyncadd [#allocation6], %s31
      %s33 = sshll.u32 [#allocation5], 4
      %s34 = int_to_ptr.vmem [resolvable:$true] %s33
      %39 = dma.hbm_to_vmem [thread:$0]  %s3, 2048, %s34, [#allocation6], 128, 128, 8
    $region17: #{nacjac_feedforward.1} parent=1 // pred_fallthru
      _
    // Predicated region
    $region18: #{nacjac_feedforward.1} parent=1 // pred_check
      _
    $region19: #{nacjac_feedforward.1} parent=1 // pred_check_branch
      %41 = sbr.rel (0) target = $region21
    $region20: #{nacjac_feedforward.1} parent=1 // pred_region
      _
    $region21: #{nacjac_feedforward.1} parent=1 // pred_fallthru
      _
    // Predicated region
    $region22: #{nacjac_feedforward.1} parent=1 // pred_check
      _
    $region23: #{nacjac_feedforward.1} parent=1 // pred_check_branch
      %43 = sbr.rel (0) target = $region25
    $region24: #{nacjac_feedforward.1} parent=1 // pred_region
      %44 = dma.done [#allocation4], 2048
    $region25: #{nacjac_feedforward.1} parent=1 // pred_fallthru
      _
    // Predicated region
    $region26: #{nacjac_feedforward.1} parent=1 // pred_check
      _
    $region27: #{nacjac_feedforward.1} parent=1 // pred_check_branch
      %46 = sbr.rel (0) target = $region29
    $region28: #{nacjac_feedforward.1} parent=1 // pred_region
      %47 = dma.done [#allocation6], 2048
    $region29: #{nacjac_feedforward.1} parent=1 // pred_fallthru
      _
    %p48 = scmp.eq.s32.totalorder 0, 0
    // Predicated region
    $region30: #{nacjac_feedforward.1} parent=1 // pred_check
      %p49 = pneg %p48
    $region31: #{nacjac_feedforward.1} parent=1 // pred_check_branch
      %51 = sbr.rel (%p49) target = $region33
    $region32: #{nacjac_feedforward.1} parent=1 // pred_region
      %52 = vst [vmem:[#allocation2] sm:$0xff] 0.0
      %53 = vst [vmem:[#allocation2 + $0x8] sm:$0xff] 0.0
    $region33: #{nacjac_feedforward.1} parent=1 // pred_fallthru
      _
    %v54 = vld [vmem:[%s0] sm:$0xff]
    %v55 = vld [vmem:[%s0 + $0x8] sm:$0xff]
    %v56 = vld [vmem:[#allocation3] sm:$0xff]
    %v57 = vld [vmem:[#allocation3 + $0x8] sm:$0xff]
    %v58 = vld [vmem:[#allocation3 + $0x10] sm:$0xff]
    %v59 = vld [vmem:[#allocation3 + $0x18] sm:$0xff]
    %v60 = vld [vmem:[#allocation3 + $0x20] sm:$0xff]
    %v61 = vld [vmem:[#allocation3 + $0x28] sm:$0xff]
    %v62 = vld [vmem:[#allocation3 + $0x30] sm:$0xff]
    %v63 = vld [vmem:[#allocation3 + $0x38] sm:$0xff]
    %v64 = vld [vmem:[#allocation3 + $0x40] sm:$0xff]
    %v65 = vld [vmem:[#allocation3 + $0x48] sm:$0xff]
    %v66 = vld [vmem:[#allocation3 + $0x50] sm:$0xff]
    %v67 = vld [vmem:[#allocation3 + $0x58] sm:$0xff]
    %v68 = vld [vmem:[#allocation3 + $0x60] sm:$0xff]
    %v69 = vld [vmem:[#allocation3 + $0x68] sm:$0xff]
    %v70 = vld [vmem:[#allocation3 + $0x70] sm:$0xff]
    %v71 = vld [vmem:[#allocation3 + $0x78] sm:$0xff]
    %v72 = vld [vmem:[%s2] sm:$0x1]
    %v74 = vlaneseq
    %v75 = vshrl.u32 %v74, 7
    %v76 = vsub.s32 0, %v75
    %v77 = vrot.slane %v72, %v76
    %79 = vmatprep.subr.mxu0 0.0
    %80 = vmatpush1.msra.mxu0 %v71
    %81 = vmatprep.subr.mxu0 0.0
    %82 = vmatpush1.msra.mxu0 %v70
    %83 = vmatprep.subr.mxu0 0.0
    %84 = vmatpush1.msra.mxu0 %v69
    %85 = vmatprep.subr.mxu0 0.0
    %86 = vmatpush1.msra.mxu0 %v68
    %87 = vmatprep.subr.mxu0 0.0
    %88 = vmatpush1.msra.mxu0 %v67
    %89 = vmatprep.subr.mxu0 0.0
    %90 = vmatpush1.msra.mxu0 %v66
    %91 = vmatprep.subr.mxu0 0.0
    %92 = vmatpush1.msra.mxu0 %v65
    %93 = vmatprep.subr.mxu0 0.0
    %94 = vmatpush1.msra.mxu0 %v64
    %95 = vmatprep.subr.mxu0 0.0
    %96 = vmatpush1.msra.mxu0 %v63
    %97 = vmatprep.subr.mxu0 0.0
    %98 = vmatpush1.msra.mxu0 %v62
    %99 = vmatprep.subr.mxu0 0.0
    %100 = vmatpush1.msra.mxu0 %v61
    %101 = vmatprep.subr.mxu0 0.0
    %102 = vmatpush1.msra.mxu0 %v60
    %103 = vmatprep.subr.mxu0 0.0
    %104 = vmatpush1.msra.mxu0 %v59
    %105 = vmatprep.subr.mxu0 0.0
    %106 = vmatpush1.msra.mxu0 %v58
    %107 = vmatprep.subr.mxu0 0.0
    %108 = vmatpush1.msra.mxu0 %v57
    %109 = vmatprep.subr.mxu0 0.0
    %110 = vmatpush1.msra.mxu0 %v56
    %111 = vmatprep.subr.mxu0 0.0
    %112 = vmatpush2.msra.mxu0 0.0
    %113 = vmatprep.subr.mxu0 0.0
    %114 = vmatpush2.msra.mxu0 0.0
    %115 = vmatprep.subr.mxu0 0.0
    %116 = vmatpush2.msra.mxu0 0.0
    %117 = vmatprep.subr.mxu0 0.0
    %118 = vmatpush2.msra.mxu0 0.0
    %119 = vmatprep.subr.mxu0 0.0
    %120 = vmatpush2.msra.mxu0 0.0
    %121 = vmatprep.subr.mxu0 0.0
    %122 = vmatpush2.msra.mxu0 0.0
    %123 = vmatprep.subr.mxu0 0.0
    %124 = vmatpush2.msra.mxu0 0.0
    %125 = vmatprep.subr.mxu0 0.0
    %126 = vmatpush2.msra.mxu0 0.0
    %127 = vmatprep.subr.mxu0 0.0
    %128 = vmatpush2.msra.mxu0 0.0
    %129 = vmatprep.subr.mxu0 0.0
    %130 = vmatpush2.msra.mxu0 0.0
    %131 = vmatprep.subr.mxu0 0.0
    %132 = vmatpush2.msra.mxu0 0.0
    %133 = vmatprep.subr.mxu0 0.0
    %134 = vmatpush2.msra.mxu0 0.0
    %135 = vmatprep.subr.mxu0 0.0
    %136 = vmatpush2.msra.mxu0 0.0
    %137 = vmatprep.subr.mxu0 0.0
    %138 = vmatpush2.msra.mxu0 0.0
    %139 = vmatprep.subr.mxu0 0.0
    %140 = vmatpush2.msra.mxu0 0.0
    %141 = vmatprep.subr.mxu0 0.0
    %142 = vmatpush2.msra.mxu0 0.0
    %143 = vmatprep.mubr.f32.mxu0 0.0
    %144 = vmatmul.mubr.f32.gmra.mxu0 %v54
    %v145 = vpop.f32.mrf.mxu0
    %v146 = vadd.f32 %v77, %v145
    %v147 = vpop.f32.mrf.mxu0
    %148 = vmatprep.mubr.f32.mxu0 0.0
    %149 = vmatmul.mubr.f32.gmra.mxu0 %v55
    %v150 = vpop.f32.mrf.mxu0
    %v151 = vadd.f32 %v77, %v150
    %v152 = vpop.f32.mrf.mxu0
    %153 = vdwg.mxu0
    %v154 = vmax.f32 %v146, 0.0
    %v155 = vmax.f32 %v151, 0.0
    %v156 = vld [vmem:[#allocation2] sm:$0xff]
    %v157 = vld [vmem:[#allocation2 + $0x8] sm:$0xff]
    %v158 = vld [vmem:[#allocation5] sm:$0xff]
    %v159 = vld [vmem:[#allocation5 + $0x8] sm:$0xff]
    %v160 = vld [vmem:[#allocation5 + $0x10] sm:$0xff]
    %v161 = vld [vmem:[#allocation5 + $0x18] sm:$0xff]
    %v162 = vld [vmem:[#allocation5 + $0x20] sm:$0xff]
    %v163 = vld [vmem:[#allocation5 + $0x28] sm:$0xff]
    %v164 = vld [vmem:[#allocation5 + $0x30] sm:$0xff]
    %v165 = vld [vmem:[#allocation5 + $0x38] sm:$0xff]
    %v166 = vld [vmem:[#allocation5 + $0x40] sm:$0xff]
    %v167 = vld [vmem:[#allocation5 + $0x48] sm:$0xff]
    %v168 = vld [vmem:[#allocation5 + $0x50] sm:$0xff]
    %v169 = vld [vmem:[#allocation5 + $0x58] sm:$0xff]
    %v170 = vld [vmem:[#allocation5 + $0x60] sm:$0xff]
    %v171 = vld [vmem:[#allocation5 + $0x68] sm:$0xff]
    %v172 = vld [vmem:[#allocation5 + $0x70] sm:$0xff]
    %v173 = vld [vmem:[#allocation5 + $0x78] sm:$0xff]
    %174 = vmatprep.subr.mxu0 0.0
    %175 = vmatpush1.msra.mxu0 %v173
    %176 = vmatprep.subr.mxu0 0.0
    %177 = vmatpush1.msra.mxu0 %v172
    %178 = vmatprep.subr.mxu0 0.0
    %179 = vmatpush1.msra.mxu0 %v171
    %180 = vmatprep.subr.mxu0 0.0
    %181 = vmatpush1.msra.mxu0 %v170
    %182 = vmatprep.subr.mxu0 0.0
    %183 = vmatpush1.msra.mxu0 %v169
    %184 = vmatprep.subr.mxu0 0.0
    %185 = vmatpush1.msra.mxu0 %v168
    %186 = vmatprep.subr.mxu0 0.0
    %187 = vmatpush1.msra.mxu0 %v167
    %188 = vmatprep.subr.mxu0 0.0
    %189 = vmatpush1.msra.mxu0 %v166
    %190 = vmatprep.subr.mxu0 0.0
    %191 = vmatpush1.msra.mxu0 %v165
    %192 = vmatprep.subr.mxu0 0.0
    %193 = vmatpush1.msra.mxu0 %v164
    %194 = vmatprep.subr.mxu0 0.0
    %195 = vmatpush1.msra.mxu0 %v163
    %196 = vmatprep.subr.mxu0 0.0
    %197 = vmatpush1.msra.mxu0 %v162
    %198 = vmatprep.subr.mxu0 0.0
    %199 = vmatpush1.msra.mxu0 %v161
    %200 = vmatprep.subr.mxu0 0.0
    %201 = vmatpush1.msra.mxu0 %v160
    %202 = vmatprep.subr.mxu0 0.0
    %203 = vmatpush1.msra.mxu0 %v159
    %204 = vmatprep.subr.mxu0 0.0
    %205 = vmatpush1.msra.mxu0 %v158
    %206 = vmatprep.subr.mxu0 0.0
    %207 = vmatpush2.msra.mxu0 0.0
    %208 = vmatprep.subr.mxu0 0.0
    %209 = vmatpush2.msra.mxu0 0.0
    %210 = vmatprep.subr.mxu0 0.0
    %211 = vmatpush2.msra.mxu0 0.0
    %212 = vmatprep.subr.mxu0 0.0
    %213 = vmatpush2.msra.mxu0 0.0
    %214 = vmatprep.subr.mxu0 0.0
    %215 = vmatpush2.msra.mxu0 0.0
    %216 = vmatprep.subr.mxu0 0.0
    %217 = vmatpush2.msra.mxu0 0.0
    %218 = vmatprep.subr.mxu0 0.0
    %219 = vmatpush2.msra.mxu0 0.0
    %220 = vmatprep.subr.mxu0 0.0
    %221 = vmatpush2.msra.mxu0 0.0
    %222 = vmatprep.subr.mxu0 0.0
    %223 = vmatpush2.msra.mxu0 0.0
    %224 = vmatprep.subr.mxu0 0.0
    %225 = vmatpush2.msra.mxu0 0.0
    %226 = vmatprep.subr.mxu0 0.0
    %227 = vmatpush2.msra.mxu0 0.0
    %228 = vmatprep.subr.mxu0 0.0
    %229 = vmatpush2.msra.mxu0 0.0
    %230 = vmatprep.subr.mxu0 0.0
    %231 = vmatpush2.msra.mxu0 0.0
    %232 = vmatprep.subr.mxu0 0.0
    %233 = vmatpush2.msra.mxu0 0.0
    %234 = vmatprep.subr.mxu0 0.0
    %235 = vmatpush2.msra.mxu0 0.0
    %236 = vmatprep.subr.mxu0 0.0
    %237 = vmatpush2.msra.mxu0 0.0
    %238 = vmatprep.mubr.f32.mxu0 0.0
    %239 = vmatmul.mubr.f32.gmra.mxu0 %v154
    %v240 = vpop.f32.mrf.mxu0
    %v241 = vadd.f32 0.0, %v240
    %v242 = vpop.f32.mrf.mxu0
    %243 = vmatprep.mubr.f32.mxu0 0.0
    %244 = vmatmul.mubr.f32.gmra.mxu0 %v155
    %v245 = vpop.f32.mrf.mxu0
    %v246 = vadd.f32 0.0, %v245
    %v247 = vpop.f32.mrf.mxu0
    %248 = vdwg.mxu0
    %v249 = vadd.f32 %v156, %v241
    %v250 = vadd.f32 %v157, %v246
    %251 = vst [vmem:[#allocation2] sm:$0xff] %v249
    %252 = vst [vmem:[#allocation2 + $0x8] sm:$0xff] %v250
    // Predicated region
    $region34: #{nacjac_feedforward.1} parent=1 // pred_check
      %p253 = pneg %p48
    $region35: #{nacjac_feedforward.1} parent=1 // pred_check_branch
      %255 = sbr.rel (%p253) target = $region37
    $region36: #{nacjac_feedforward.1} parent=1 // pred_region
      %v256 = vld [vmem:[#allocation2] sm:$0xff]
      %v257 = vld [vmem:[#allocation2 + $0x8] sm:$0xff]
      %v258 = vld [vmem:[%s4] sm:$0x1]
      %v260 = vlaneseq
      %v261 = vshrl.u32 %v260, 7
      %v262 = vsub.s32 0, %v261
      %v263 = vrot.slane %v258, %v262
      %v265 = vadd.f32 %v256, %v263
      %v266 = vadd.f32 %v257, %v263
      %267 = vst [vmem:[%s5] sm:$0xff] %v265
      %268 = vst [vmem:[%s5 + $0x8] sm:$0xff] %v266
    $region37: #{nacjac_feedforward.1} parent=1 // pred_fallthru
      _
    // Predicated region
    $region38: #{nacjac_feedforward.1} parent=1 // pred_check
      _
    $region39: #{nacjac_feedforward.1} parent=1 // pred_check_branch
      %270 = sbr.rel (0) target = $region41
    $region40: #{nacjac_feedforward.1} parent=1 // pred_region
      _
    $region41: #{nacjac_feedforward.1} parent=1 // pred_fallthru
      _
    // Predicated region
    $region42: #{nacjac_feedforward.1} parent=1 // pred_check
      _
    $region43: #{nacjac_feedforward.1} parent=1 // pred_check_branch
      %272 = sbr.rel (0) target = $region45
    $region44: #{nacjac_feedforward.1} parent=1 // pred_region
      _
    $region45: #{nacjac_feedforward.1} parent=1 // pred_fallthru
      _
    %273 = vsyncpa [#allocation4], 1
    %274 = vsyncpa [#allocation6], 1

</llo_original>
